<compile_context>
chip_gen: v6e
topology: v6e:2x2x1
jax: 0.10.0
libtpu: 0.0.40
codegen_flags: <defaults>
</compile_context>

<pallas_src>
import functools
import math

import jax
import jax.numpy as jnp
from jax.experimental import pallas as pl
from jax.experimental.pallas import tpu as pltpu


# --------------------------------------------------------------------------- #
# helpers
# --------------------------------------------------------------------------- #
def _round_up(x, n):
    return (x + n - 1) // n * n


def _vmem_capacity_bytes():
    try:
        return int(pltpu.get_tpu_info().vmem_capacity_bytes)
    except Exception:
        return 64 * 1024 * 1024  # conservative: v7x per-TensorCore VMEM


def _pick_block_c(out_features, in_features, K, w_itemsize, x_itemsize,
                  vmem_cap, tb=256, weight_buffers=2):
    """Largest class tile (multiple of 128) whose pipelined working set
    (weights + x + label + f32 output tiles) fits VMEM with headroom, then
    rebalanced so padding stays minimal."""
    c_blocks = _round_up(out_features, 128) // 128
    budget = int(min(vmem_cap - (24 << 20), vmem_cap * 0.7))
    d_lane = _round_up(in_features, 128)
    fixed = 2 * tb * d_lane * x_itemsize + 2 * tb * 128 * 4     # xn + label
    fit_blocks = 1
    for nb in range(1, c_blocks + 1):
        tc = nb * 128
        need = (weight_buffers * K * in_features * tc * w_itemsize
                + 2 * tb * tc * 4 + fixed)
        if need <= budget:
            fit_blocks = nb
        else:
            break
    n_tiles = -(-c_blocks // fit_blocks)      # cdiv
    tile_blocks = -(-c_blocks // n_tiles)     # rebalance -> minimal padding
    return tile_blocks * 128


def prepare_weight(weight, out_features, K, *, compute_dtype=jnp.bfloat16,
                   block_c=None, batch_hint=256, weight_buffers=2):
    """One-time (init-time) preparation of the PyTorch (out_features*K, D)
    parameter:
      1. L2-normalize each sub-center row in f32 (F.normalize semantics).
      2. Re-layout to tile-contiguous (C_pad//block_c, K, D, block_c).
      3. Cast to the streaming/compute dtype.
    Returns (weight_prepared, block_c)."""
    CK, D = weight.shape
    C = out_features
    assert CK == C * K, "weight must be (out_features*K, in_features)"

    w32 = weight.astype(jnp.float32)
    # == w / max(||w||, 1e-12)  (F.normalize semantics), done ONCE here.
    wn = w32 * jax.lax.rsqrt(
        jnp.maximum(jnp.sum(w32 * w32, axis=1, keepdims=True), 1e-24))

    itemsize = jnp.dtype(compute_dtype).itemsize
    if block_c is None:
        block_c = _pick_block_c(C, D, K, itemsize, itemsize,
                                _vmem_capacity_bytes(), tb=min(256, batch_hint),
                                weight_buffers=weight_buffers)
    assert block_c % 128 == 0 and block_c >= 128
    C_pad = _round_up(C, block_c)

    # PyTorch row c*K + k  <->  sub-center k of class c (view(-1, C, K) semantics)
    w = wn.reshape(C, K, D)                    # [c, k, :]
    w = jnp.transpose(w, (1, 2, 0))            # (K, D, C)
    if C_pad != C:
        w = jnp.pad(w, ((0, 0), (0, 0), (0, C_pad - C)))
    n_tiles = C_pad // block_c
    w = w.reshape(K, D, n_tiles, block_c)
    w = jnp.transpose(w, (2, 0, 1, 3))         # (n_tiles, K, D, TC) -- tile-contiguous
    return w.astype(compute_dtype), block_c


# --------------------------------------------------------------------------- #
# kernel
# --------------------------------------------------------------------------- #
def _subcenter_arcface_kernel(xn_ref, w_ref, label_ref, out_ref, *,
                              K, s, m, easy_margin):
    cos_m = math.cos(m)
    sin_m = math.sin(m)
    th = math.cos(math.pi - m)
    mm = math.sin(math.pi - m) * m

    j = pl.program_id(1)                       # class-tile index
    xn = xn_ref[...]                           # (TB, D), compute dtype (pre-normalized)

    # K sub-center cosine tiles.  Weights are pre-normalized at prepare time,
    # so the MXU output IS the cosine; only the max over sub-centers remains.
    cosine = None
    for k in range(K):                         # K is small: static unroll
        ck = jax.lax.dot_general(xn, w_ref[k], (((1,), (0,)), ((), ())),
                                 preferred_element_type=jnp.float32)   # (TB, TC)
        cosine = ck if cosine is None else jnp.maximum(cosine, ck)

    tb, tc = cosine.shape
    label = label_ref[...]                     # (TB, 1) int32
    col = j * tc + jax.lax.broadcasted_iota(jnp.int32, (tb, tc), 1)
    is_target = col == label                   # (TB, TC) -- at most one True per row

    # Margin math only for the target column: masked row-max pulls the target
    # cosine into a (TB, 1) vector (-2.0 sentinel: cosine is always >= -1, so
    # rows whose target class is outside this tile never select phi anyway).
    tgt = jnp.max(jnp.where(is_target, cosine, -2.0), axis=1, keepdims=True)
    sine = jnp.sqrt(jnp.clip(1.0 - tgt * tgt, 0.0, 1.0))
    phi = tgt * cos_m - sine * sin_m
    if easy_margin:
        phi = jnp.where(tgt > 0.0, phi, tgt)
    else:
        phi = jnp.where(tgt > th, phi, tgt - mm)

    out_ref[...] = (jnp.where(is_target, phi, cosine)
                    * jnp.float32(s)).astype(out_ref.dtype)


# --------------------------------------------------------------------------- #
# wrapper
# --------------------------------------------------------------------------- #
def subcenter_arcface_forward(x, w_prepared, label, *, out_features, K=3,
                              s=30.0, m=0.5, easy_margin=False, block_c,
                              out_dtype=jnp.float32, weight_buffers=2):
    """x: (B, D); w_prepared: (C_pad//block_c, K, D, block_c) from
    prepare_weight(); label: (B,) int.  Returns (B, out_features) out_dtype."""
    B, D = x.shape
    n_tiles, Kw, Dw, TC = w_prepared.shape
    assert Kw == K and Dw == D and TC == block_c
    C_pad = n_tiles * TC
    assert C_pad >= out_features

    compute_dtype = w_prepared.dtype

    # L2-normalize the input once here (f32 math, F.normalize semantics) and
    # cast to the streaming dtype: no in-kernel xn cache, and both grid axes
    # become independent ("parallel", "parallel").
    x32 = x.astype(jnp.float32)
    ssq = jnp.sum(x32 * x32, axis=1, keepdims=True)
    xn = (x32 * jax.lax.rsqrt(jnp.maximum(ssq, 1e-24))).astype(compute_dtype)

    B16 = _round_up(B, 16)                     # sublane-safe for bf16 tiles too
    TB = min(256, B16)
    B_pad = _round_up(B16, TB)

    label_p = label.reshape(-1).astype(jnp.int32)
    if B_pad != B:
        xn = jnp.pad(xn, ((0, B_pad - B), (0, 0)))
        label_p = jnp.pad(label_p, ((0, B_pad - B),))
    label_p = label_p.reshape(B_pad, 1)

    grid = (B_pad // TB, C_pad // TC)

    # VMEM sizing: pipelined weight tiles + double-buffered xn/label/out tiles,
    # plus headroom for compiler-internal scratch; capped at capacity-16MiB so
    # it stays inside v7x's 64 MiB per-TensorCore VMEM.
    w_item = jnp.dtype(compute_dtype).itemsize
    o_item = jnp.dtype(out_dtype).itemsize
    need = (weight_buffers * K * D * TC * w_item
            + 2 * TB * TC * o_item
            + 2 * TB * _round_up(D, 128) * w_item
            + 2 * TB * 128 * 4)
    vmem_cap = _vmem_capacity_bytes()
    vmem_limit = int(min(max(need + (16 << 20), 32 << 20),
                         vmem_cap - (16 << 20)))

    # Optional deeper weight pipelining (e.g. Buffered(3) on v5e when DMA is
    # exposed); default 2-deep keeps the larger tile on v7x.
    w_spec_kwargs = {}
    if weight_buffers != 2:
        w_spec_kwargs["pipeline_mode"] = pl.Buffered(weight_buffers)

    kernel = functools.partial(
        _subcenter_arcface_kernel, K=K, s=float(s), m=float(m),
        easy_margin=bool(easy_margin))

    out = pl.pallas_call(
        kernel,
        out_shape=jax.ShapeDtypeStruct((B_pad, C_pad), out_dtype),
        grid_spec=pltpu.PrefetchScalarGridSpec(
            num_scalar_prefetch=0,
            grid=grid,
            in_specs=[
                pl.BlockSpec((TB, D), lambda i, j: (i, 0)),        # xn (compute dtype)
                pl.BlockSpec((None, K, D, TC),                     # contiguous weight tile
                             lambda i, j: (j, 0, 0, 0), **w_spec_kwargs),
                pl.BlockSpec((TB, 1), lambda i, j: (i, 0)),        # label
            ],
            out_specs=pl.BlockSpec((TB, TC), lambda i, j: (i, j)),
        ),
        compiler_params=pltpu.CompilerParams(
            dimension_semantics=("parallel", "parallel"),
            vmem_limit_bytes=vmem_limit,
        ),
    )(xn, w_prepared, label_p)

    return out[:B, :out_features]


# --------------------------------------------------------------------------- #
# references (pure JAX)
# --------------------------------------------------------------------------- #
def _margin_tail(cosine, label, out_features, s, m, easy_margin):
    cos_m, sin_m = math.cos(m), math.sin(m)
    th = math.cos(math.pi - m)
    mm = math.sin(math.pi - m) * m
    sine = jnp.sqrt(jnp.clip(1.0 - cosine ** 2, 0.0, 1.0))
    phi = cosine * cos_m - sine * sin_m
    if easy_margin:
        phi = jnp.where(cosine > 0, phi, cosine)
    else:
        phi = jnp.where(cosine > th, phi, cosine - mm)
    one_hot = jax.nn.one_hot(label, out_features, dtype=cosine.dtype)
    return (one_hot * phi + (1.0 - one_hot) * cosine) * s


def _reference_f32(x, weight, label, *, out_features, K, s, m, easy_margin):
    xn = x / jnp.maximum(jnp.linalg.norm(x, axis=1, keepdims=True), 1e-12)
    wn = weight / jnp.maximum(jnp.linalg.norm(weight, axis=1, keepdims=True), 1e-12)
    cosine = xn @ wn.T
    cosine = cosine.reshape(-1, out_features, K).max(axis=2)
    return _margin_tail(cosine, label, out_features, s, m, easy_margin)


def _reference_bf16(x, weight, label, *, out_features, K, s, m, easy_margin):
    """Mimics the kernel's bf16 streaming: f32-normalize, cast, bf16 matmul."""
    xn = x / jnp.maximum(jnp.linalg.norm(x, axis=1, keepdims=True), 1e-12)
    wn = weight / jnp.maximum(jnp.linalg.norm(weight, axis=1, keepdims=True), 1e-12)
    xb = xn.astype(jnp.bfloat16)
    wb = wn.astype(jnp.bfloat16)
    cosine = jax.lax.dot_general(xb, wb, (((1,), (1,)), ((), ())),
                                 preferred_element_type=jnp.float32)
    cosine = cosine.reshape(-1, out_features, K).max(axis=2)
    return _margin_tail(cosine, label, out_features, s, m, easy_margin)


# --------------------------------------------------------------------------- #
# demo / self-test
# --------------------------------------------------------------------------- #
if __name__ == "__main__":
    B, in_features, out_features, K = 8, 32, 200, 3
    s, m, easy_margin = 30.0, 0.5, False

    key = jax.random.PRNGKey(0)
    kx, kw, kl = jax.random.split(key, 3)

    x = jax.random.normal(kx, (B, in_features), dtype=jnp.float32)
    # xavier_uniform_ on the (out_features*K, in_features) parameter
    bound = math.sqrt(6.0 / (in_features + out_features * K))
    weight = jax.random.uniform(kw, (out_features * K, in_features),
                                dtype=jnp.float32, minval=-bound, maxval=bound)
    label = jax.random.randint(kl, (B,), 0, out_features, dtype=jnp.int32)

    ref_f = _reference_f32(x, weight, label, out_features=out_features, K=K,
                           s=s, m=m, easy_margin=easy_margin)
    ref_b = _reference_bf16(x, weight, label, out_features=out_features, K=K,
                            s=s, m=m, easy_margin=easy_margin)

    # ---- bf16 weight streaming (production default), block_c=128 forces a
    #      multi-class-tile grid even at this small size. ----
    w_bf16, tc = prepare_weight(weight, out_features, K,
                                compute_dtype=jnp.bfloat16, block_c=128,
                                batch_hint=B)
    out_bf16 = subcenter_arcface_forward(
        x, w_bf16, label, out_features=out_features, K=K, s=s, m=m,
        easy_margin=easy_margin, block_c=tc)
    out_bf16 = jax.block_until_ready(out_bf16)
    assert out_bf16.shape == (B, out_features)
    assert jnp.allclose(out_bf16, ref_b, atol=2e-2, rtol=2e-2), \
        float(jnp.max(jnp.abs(out_bf16 - ref_b)))

    # ---- bf16, auto-sized class tile (exercises _pick_block_c + layout). ----
    w_auto, tc_auto = prepare_weight(weight, out_features, K,
                                     compute_dtype=jnp.bfloat16, batch_hint=B)
    out_auto = subcenter_arcface_forward(
        x, w_auto, label, out_features=out_features, K=K, s=s, m=m,
        easy_margin=easy_margin, block_c=tc_auto)
    out_auto = jax.block_until_ready(out_auto)
    assert jnp.allclose(out_auto, ref_b, atol=2e-2, rtol=2e-2), \
        float(jnp.max(jnp.abs(out_auto - ref_b)))

    # ---- f32 path, checked against the exact f32 reference. ----
    w_f32, tc32 = prepare_weight(weight, out_features, K,
                                 compute_dtype=jnp.float32, block_c=128,
                                 batch_hint=B)
    out_f32 = subcenter_arcface_forward(
        x, w_f32, label, out_features=out_features, K=K, s=s, m=m,
        easy_margin=easy_margin, block_c=tc32)
    out_f32 = jax.block_until_ready(out_f32)
    assert jnp.allclose(out_f32, ref_f, atol=1e-3, rtol=1e-3), \
        float(jnp.max(jnp.abs(out_f32 - ref_f)))

    print("KERNEL_OK")
</pallas_src>

<mosaic_0001>
module attributes {stable_mosaic.version = 11 : i64} {
  func.func @_subcenter_arcface_kernel(%arg0: i32, %arg1: i32, %arg2: memref<16x32xbf16, #tpu.memory_space<vmem>>, %arg3: memref<1x3x32x128xbf16, #tpu.memory_space<vmem>>, %arg4: memref<16x1xi32, #tpu.memory_space<vmem>>, %arg5: memref<16x128xf32, #tpu.memory_space<vmem>>) attributes {dimension_semantics = [#tpu.dimension_semantics<parallel>, #tpu.dimension_semantics<parallel>], iteration_bounds = array<i64: 1, 2>, scalar_prefetch = 0 : i64, scratch_operands = 0 : i64, tpu.core_type = #tpu.core_type<tc>, window_params = [{transform_indices = @transform_0, window_bounds = array<i64: 16, 32>}, {transform_indices = @transform_1, window_bounds = array<i64: 1, 3, 32, 128>}, {transform_indices = @transform_2, window_bounds = array<i64: 16, 1>}, {transform_indices = @transform_3, window_bounds = array<i64: 16, 128>}]} {
    %c0 = arith.constant 0 : index
    %c0_0 = arith.constant 0 : index
    %0 = vector.load %arg2[%c0, %c0_0] : memref<16x32xbf16, #tpu.memory_space<vmem>>, vector<16x32xbf16>
    %c0_1 = arith.constant 0 : index
    %c0_2 = arith.constant 0 : index
    %c0_3 = arith.constant 0 : index
    %c0_4 = arith.constant 0 : index
    %1 = vector.load %arg3[%c0_1, %c0_2, %c0_3, %c0_4] : memref<1x3x32x128xbf16, #tpu.memory_space<vmem>>, vector<1x1x32x128xbf16>
    %2 = vector.shape_cast %1 : vector<1x1x32x128xbf16> to vector<32x128xbf16>
    %cst = arith.constant dense<0.000000e+00> : vector<16x128xf32>
    %3 = tpu.matmul %0, %2, %cst {dimension_numbers = #tpu.dot_dimension_numbers<[1], [0], [0], [1], [0, 0, 1, 1], [], []>} : vector<16x32xbf16>, vector<32x128xbf16>, vector<16x128xf32> -> vector<16x128xf32>
    %c0_5 = arith.constant 0 : index
    %c1 = arith.constant 1 : index
    %c0_6 = arith.constant 0 : index
    %c0_7 = arith.constant 0 : index
    %4 = vector.load %arg3[%c0_5, %c1, %c0_6, %c0_7] : memref<1x3x32x128xbf16, #tpu.memory_space<vmem>>, vector<1x1x32x128xbf16>
    %5 = vector.shape_cast %4 : vector<1x1x32x128xbf16> to vector<32x128xbf16>
    %cst_8 = arith.constant dense<0.000000e+00> : vector<16x128xf32>
    %6 = tpu.matmul %0, %5, %cst_8 {dimension_numbers = #tpu.dot_dimension_numbers<[1], [0], [0], [1], [0, 0, 1, 1], [], []>} : vector<16x32xbf16>, vector<32x128xbf16>, vector<16x128xf32> -> vector<16x128xf32>
    %7 = arith.maximumf %3, %6 : vector<16x128xf32>
    %c0_9 = arith.constant 0 : index
    %c2 = arith.constant 2 : index
    %c0_10 = arith.constant 0 : index
    %c0_11 = arith.constant 0 : index
    %8 = vector.load %arg3[%c0_9, %c2, %c0_10, %c0_11] : memref<1x3x32x128xbf16, #tpu.memory_space<vmem>>, vector<1x1x32x128xbf16>
    %9 = vector.shape_cast %8 : vector<1x1x32x128xbf16> to vector<32x128xbf16>
    %cst_12 = arith.constant dense<0.000000e+00> : vector<16x128xf32>
    %10 = tpu.matmul %0, %9, %cst_12 {dimension_numbers = #tpu.dot_dimension_numbers<[1], [0], [0], [1], [0, 0, 1, 1], [], []>} : vector<16x32xbf16>, vector<32x128xbf16>, vector<16x128xf32> -> vector<16x128xf32>
    %11 = arith.maximumf %7, %10 : vector<16x128xf32>
    %c0_13 = arith.constant 0 : index
    %c0_14 = arith.constant 0 : index
    %12 = vector.load %arg4[%c0_13, %c0_14] : memref<16x1xi32, #tpu.memory_space<vmem>>, vector<16x1xi32>
    %c128_i32 = arith.constant 128 : i32
    %13 = arith.muli %arg1, %c128_i32 : i32
    %14 = tpu.iota {dimensions = array<i32: 1>} : vector<16x128xi32>
    %15 = vector.broadcast %13 : i32 to vector<16x128xi32>
    %16 = arith.addi %15, %14 : vector<16x128xi32>
    %17 = vector.broadcast %12 : vector<16x1xi32> to vector<16x128xi32>
    %18 = arith.cmpi eq, %16, %17 : vector<16x128xi32>
    %cst_15 = arith.constant -2.000000e+00 : f32
    %19 = vector.broadcast %cst_15 : f32 to vector<16x128xf32>
    %20 = arith.select %18, %11, %19 : vector<16x128xi1>, vector<16x128xf32>
    %cst_16 = arith.constant dense<0xFF800000> : vector<16xf32>
    %21 = vector.multi_reduction <maximumf>, %20, %cst_16 [1] : vector<16x128xf32> to vector<16xf32>
    %22 = vector.shape_cast %21 : vector<16xf32> to vector<16x1xf32>
    %23 = arith.mulf %22, %22 : vector<16x1xf32>
    %cst_17 = arith.constant 1.000000e+00 : f32
    %24 = vector.broadcast %cst_17 : f32 to vector<16x1xf32>
    %25 = arith.subf %24, %23 : vector<16x1xf32>
    %cst_18 = arith.constant 0.000000e+00 : f32
    %cst_19 = arith.constant 1.000000e+00 : f32
    %26 = vector.broadcast %cst_18 : f32 to vector<16x1xf32>
    %27 = arith.maximumf %26, %25 : vector<16x1xf32>
    %28 = vector.broadcast %cst_19 : f32 to vector<16x1xf32>
    %29 = arith.minimumf %28, %27 : vector<16x1xf32>
    %30 = math.sqrt %29 : vector<16x1xf32>
    %cst_20 = arith.constant 0.87758255 : f32
    %31 = vector.broadcast %cst_20 : f32 to vector<16x1xf32>
    %32 = arith.mulf %22, %31 : vector<16x1xf32>
    %cst_21 = arith.constant 0.47942555 : f32
    %33 = vector.broadcast %cst_21 : f32 to vector<16x1xf32>
    %34 = arith.mulf %30, %33 : vector<16x1xf32>
    %35 = arith.subf %32, %34 : vector<16x1xf32>
    %cst_22 = arith.constant -0.87758255 : f32
    %36 = vector.broadcast %cst_22 : f32 to vector<16x1xf32>
    %37 = arith.cmpf ogt, %22, %36 : vector<16x1xf32>
    %cst_23 = arith.constant 0.239712775 : f32
    %38 = vector.broadcast %cst_23 : f32 to vector<16x1xf32>
    %39 = arith.subf %22, %38 : vector<16x1xf32>
    %40 = arith.select %37, %35, %39 : vector<16x1xi1>, vector<16x1xf32>
    %41 = vector.shape_cast %40 : vector<16x1xf32> to vector<16x1xf32>
    %42 = vector.broadcast %41 : vector<16x1xf32> to vector<16x128xf32>
    %43 = arith.select %18, %42, %11 : vector<16x128xi1>, vector<16x128xf32>
    %cst_24 = arith.constant 3.000000e+01 : f32
    %44 = vector.broadcast %cst_24 : f32 to vector<16x128xf32>
    %45 = arith.mulf %43, %44 : vector<16x128xf32>
    %c0_25 = arith.constant 0 : index
    %c0_26 = arith.constant 0 : index
    %46 = vector.load %arg5[%c0_25, %c0_26] : memref<16x128xf32, #tpu.memory_space<vmem>>, vector<16x128xf32>
    tpu.vector_store %arg5[%c0_25, %c0_26], %45 {strides = array<i32>} : memref<16x128xf32, #tpu.memory_space<vmem>>, vector<16x128xf32>,
    return
  }
  func.func @transform_0(%arg0: i32, %arg1: i32) -> (i32, i32) {
    %c0_i32 = arith.constant 0 : i32
    %c0_i32_0 = arith.constant 0 : i32
    return %arg0, %c0_i32 : i32, i32
  }
  func.func @transform_1(%arg0: i32, %arg1: i32) -> (i32, i32, i32, i32) {
    %c0_i32 = arith.constant 0 : i32
    %c0_i32_0 = arith.constant 0 : i32
    %c0_i32_1 = arith.constant 0 : i32
    %c0_i32_2 = arith.constant 0 : i32
    return %arg1, %c0_i32, %c0_i32_0, %c0_i32_1 : i32, i32, i32, i32
  }
  func.func @transform_2(%arg0: i32, %arg1: i32) -> (i32, i32) {
    %c0_i32 = arith.constant 0 : i32
    %c0_i32_0 = arith.constant 0 : i32
    return %arg0, %c0_i32 : i32, i32
  }
  func.func @transform_3(%arg0: i32, %arg1: i32) -> (i32, i32) {
    %c0_i32 = arith.constant 0 : i32
    return %arg0, %arg1 : i32, i32
  }
}

</mosaic_0001>

<llo_original>
// kernel: tpu_custom_call.1
$region0: #{tpu_custom_call.1}
  #allocation0 [shape = 'u32[]', space=smem, size = 0x4, offset = 0x4, fixed_abs, tag = 'smem constant byte address 0x4 - core index']
  #allocation1 [shape = 'u32[144,128]{1,0:T(1,128)}', space=vmem, size = 0x12000, scoped, tag = 'internal scratch']
  %s0 = inlined_call_operand.vmem [shape: bf16[16,32], index: 0, kind: input, shape index: {}]
  %s1 = inlined_call_operand.hbm [shape: bf16[2,3,32,128], index: 1, kind: input, shape index: {}]
  %s2 = inlined_call_operand.vmem [shape: s32[16,1], index: 2, kind: input, shape index: {}]
  %s3 = inlined_call_operand.hbm [shape: f32[16,256], index: 3, kind: output, shape index: {}]
  %s4 = sld [smem:[#allocation0]]
  $region49: #{tpu_custom_call.1} parent=0
    _
  %s6 = ssub.s32 1, %s4
  %s7 = scalar_select 0, %s6, %s4
  $region1: #{tpu_custom_call.1} parent=0
    #allocation2 [shape = 'u8[49152]{0}', space=vmem, size = 0xc000, scoped, tag = 'input window, operand 1']
    #allocation3 [shape = 's32[2]{0}', space=sflag, size = 0x8, scoped, tag = 'scoped memory for tpu_custom_call.1']
    #allocation4 [shape = 's32[2]{0}', space=sflag, size = 0x8, scoped, tag = 'scoped memory for tpu_custom_call.1']
    #allocation5 [shape = 'u8[16384]{0}', space=vmem, size = 0x4000, scoped, tag = 'output window, operand 0']
    %8 = vsyncpa [#allocation3], 0
    %s9 = scalar_lea.sflag [#allocation3], 1
    %10 = vsyncpa %s9, 0
    %11 = vsyncpa [#allocation4], 0
    %s12 = scalar_lea.sflag [#allocation4], 1
    %13 = vsyncpa %s12, 0
    loop: start=0, step=1, limit=4
    $region2: #{tpu_custom_call.1} parent=1 // loop_pre_header
      _
    $region3: #{tpu_custom_call.1} parent=1 // loop_header
      %s15 = sphi 0, %s19
      %p16 = scmp.ge.s32.totalorder %s15, 4
      %s22 = sphi 0, %s34
      %s23 = sphi 0, %s30
      %s24 = sphi 0, %s22
      %s25 = sphi 0, %s23
      %s26 = sphi 0, %s24
      %s27 = sphi 0, %s25
      %s37 = sphi 0, %s39
      %s40 = sphi 0, %s37
      %s41 = sphi 0, %s40
      %s57 = sphi 0, %s41
      %s63 = sphi 0, %s65
      %s66 = sphi 0, %s63
      %s67 = sphi 0, %s66
      %s83 = sphi 0, %s67
      %s89 = sphi 0, %s91
      %s92 = sphi 0, %s89
      %s93 = sphi 0, %s92
      %s109 = sphi 0, %s93
      %s117 = sphi 0, %s119
      %s120 = sphi 0, %s117
      %s121 = sphi 0, %s120
      %s137 = sphi 0, %s121
    $region4: #{tpu_custom_call.1} parent=1 // loop_header_branch
      %18 = sbr.rel (%p16) target = $region8
    $region5: #{tpu_custom_call.1} parent=1 // loop_body
      %s20 = ssub.s32 %s15, 1
      %s21 = ssub.s32 %s15, 2
      %s28 = sadd.s32 1, %s23
      %p29 = scmp.ge.s32.totalorder %s28, 2
      %s30 = scalar_select %p29, 0, %s28
      %s31 = sadd.s32 1, %s22
      %s32 = scalar_select %p29, %s31, %s22
      %p33 = scmp.ge.s32.totalorder %s32, 1
      %s34 = scalar_select %p33, 0, %s32
      %s35 = ssub.s32 %s22, %s34
      %p36 = scmp.eq.s32.totalorder %s35, 0
      %s38 = sadd.s32 %s37, 1
      %s39 = scalar_select %p36, %s37, %s38
      %p42 = pneg %p36
      %p43 = scmp.eq.s32.totalorder %s15, 1
      %p44 = por %p42, %p43
      %p45 = scmp.ne.s32.totalorder %s37, %s40
      %p46 = scmp.eq.s32.totalorder %s15, 0
      %p47 = por %p45, %p46
      %p48 = scmp.ne.s32.totalorder %s37, %s40
      %p49 = scmp.eq.s32.totalorder %s20, 1
      %p50 = por %p48, %p49
      %p51 = scmp.ne.s32.totalorder %s40, %s41
      %p52 = scmp.eq.s32.totalorder %s20, 0
      %p53 = por %p51, %p52
      %p54 = scmp.ne.s32.totalorder %s40, %s41
      %p55 = scmp.eq.s32.totalorder %s21, 1
      %p56 = por %p54, %p55
      %p58 = scmp.ne.s32.totalorder %s41, %s57
      %p59 = scmp.eq.s32.totalorder %s21, 0
      %p60 = por %p58, %p59
      %s61 = ssub.s32 %s23, %s30
      %p62 = scmp.eq.s32.totalorder %s61, 0
      %s64 = sadd.s32 %s63, 1
      %s65 = scalar_select %p62, %s63, %s64
      %p68 = pneg %p62
      %p69 = scmp.eq.s32.totalorder %s15, 1
      %p70 = por %p68, %p69
      %p71 = scmp.ne.s32.totalorder %s63, %s66
      %p72 = scmp.eq.s32.totalorder %s15, 0
      %p73 = por %p71, %p72
      %p74 = scmp.ne.s32.totalorder %s63, %s66
      %p75 = scmp.eq.s32.totalorder %s20, 1
      %p76 = por %p74, %p75
      %p77 = scmp.ne.s32.totalorder %s66, %s67
      %p78 = scmp.eq.s32.totalorder %s20, 0
      %p79 = por %p77, %p78
      %p80 = scmp.ne.s32.totalorder %s66, %s67
      %p81 = scmp.eq.s32.totalorder %s21, 1
      %p82 = por %p80, %p81
      %p84 = scmp.ne.s32.totalorder %s67, %s83
      %p85 = scmp.eq.s32.totalorder %s21, 0
      %p86 = por %p84, %p85
      %s87 = ssub.s32 %s22, %s34
      %p88 = scmp.eq.s32.totalorder %s87, 0
      %s90 = sadd.s32 %s89, 1
      %s91 = scalar_select %p88, %s89, %s90
      %p94 = pneg %p88
      %p95 = scmp.eq.s32.totalorder %s15, 1
      %p96 = por %p94, %p95
      %p97 = scmp.ne.s32.totalorder %s89, %s92
      %p98 = scmp.eq.s32.totalorder %s15, 0
      %p99 = por %p97, %p98
      %p100 = scmp.ne.s32.totalorder %s89, %s92
      %p101 = scmp.eq.s32.totalorder %s20, 1
      %p102 = por %p100, %p101
      %p103 = scmp.ne.s32.totalorder %s92, %s93
      %p104 = scmp.eq.s32.totalorder %s20, 0
      %p105 = por %p103, %p104
      %p106 = scmp.ne.s32.totalorder %s92, %s93
      %p107 = scmp.eq.s32.totalorder %s21, 1
      %p108 = por %p106, %p107
      %p110 = scmp.ne.s32.totalorder %s93, %s109
      %p111 = scmp.eq.s32.totalorder %s21, 0
      %p112 = por %p110, %p111
      %s113 = ssub.s32 %s22, %s34
      %s114 = ssub.s32 %s23, %s30
      %s115 = sor.u32 %s113, %s114
      %p116 = scmp.eq.s32.totalorder %s115, 0
      %s118 = sadd.s32 %s117, 1
      %s119 = scalar_select %p116, %s117, %s118
      %p122 = pneg %p116
      %p123 = scmp.eq.s32.totalorder %s15, 1
      %p124 = por %p122, %p123
      %p125 = scmp.ne.s32.totalorder %s117, %s120
      %p126 = scmp.eq.s32.totalorder %s15, 0
      %p127 = por %p125, %p126
      %p128 = scmp.ne.s32.totalorder %s117, %s120
      %p129 = scmp.eq.s32.totalorder %s20, 1
      %p130 = por %p128, %p129
      %p131 = scmp.ne.s32.totalorder %s120, %s121
      %p132 = scmp.eq.s32.totalorder %s20, 0
      %p133 = por %p131, %p132
      %p134 = scmp.ne.s32.totalorder %s120, %s121
      %p135 = scmp.eq.s32.totalorder %s21, 1
      %p136 = por %p134, %p135
      %p138 = scmp.ne.s32.totalorder %s121, %s137
      %p139 = scmp.eq.s32.totalorder %s21, 0
      %p140 = por %p138, %p139
      %p141 = scmp.le.s32.totalorder 1, %s15
      %p142 = scmp.lt.s32.totalorder %s15, 3
      %p143 = pnand %p141, %p142
      %p144 = pneg %p143
      // Predicated region
      $region9: #{tpu_custom_call.1} parent=5 // pred_check
        _
      $region10: #{tpu_custom_call.1} parent=5 // pred_check_branch
        %146 = sbr.rel (%p143) target = $region12
      $region11: #{tpu_custom_call.1} parent=5 // pred_region
        %s147 = ssub.s32 %s15, 1
        // Predicated region
        $region13: #{tpu_custom_call.1} parent=11 // pred_check
          %p148 = pneg %p53
        $region14: #{tpu_custom_call.1} parent=11 // pred_check_branch
          %150 = sbr.rel (%p148) target = $region16
        $region15: #{tpu_custom_call.1} parent=11 // pred_region
          %s151 = smul.u32 2, %s24
          %p152 = scmp.lt.s32.totalorder %s151, 1
          %s153 = scalar_select %p152, %s151, 1
          %s154 = smul.addr %s153, 4
          %s155 = scalar_lea.vmem %s0, %s154
          %s156 = smul.u32 2, %s24
        $region16: #{tpu_custom_call.1} parent=11 // pred_fallthru
          _
        // Predicated region
        $region17: #{tpu_custom_call.1} parent=11 // pred_check
          %p157 = pneg %p105
        $region18: #{tpu_custom_call.1} parent=11 // pred_check_branch
          %159 = sbr.rel (%p157) target = $region20
        $region19: #{tpu_custom_call.1} parent=11 // pred_region
          %s160 = smul.u32 2, %s24
          %p161 = scmp.lt.s32.totalorder %s160, 1
          %s162 = scalar_select %p161, %s160, 1
          %s163 = smul.addr %s162, 8
          %s164 = scalar_lea.vmem %s2, %s163
          %s165 = smul.u32 2, %s24
        $region20: #{tpu_custom_call.1} parent=11 // pred_fallthru
          _
      $region12: #{tpu_custom_call.1} parent=5 // pred_fallthru
        _
      %p166 = scmp.lt.s32.totalorder %s15, 2
      // Predicated region
      $region21: #{tpu_custom_call.1} parent=5 // pred_check
        %p167 = pneg %p166
      $region22: #{tpu_custom_call.1} parent=5 // pred_check_branch
        %169 = sbr.rel (%p167) target = $region24
      $region23: #{tpu_custom_call.1} parent=5 // pred_region
        // Predicated region
        $region25: #{tpu_custom_call.1} parent=23 // pred_check
          %p170 = pneg %p73
        $region26: #{tpu_custom_call.1} parent=23 // pred_check_branch
          %172 = sbr.rel (%p170) target = $region28
        $region27: #{tpu_custom_call.1} parent=23 // pred_region
          %s173 = sand.u32 %s63, 1
          %s174 = scalar_lea.sflag [#allocation3], %s173
          %s175 = sand.u32 %s63, 1
          %s176 = smul.addr %s175, 48
          %s177 = scalar_lea.vmem [#allocation2], %s176
          %s179 = ssub.s32 768, 768
          %180 = vsyncadd %s174, %s179
          %s181 = smul.addr %s23, 12
          %s182 = smul.addr %s181, 64
          %s183 = scalar_lea.hbm %s1, %s182
          %s184 = sshll.u32 %s177, 4
          %s185 = int_to_ptr.vmem [resolvable:$true] %s184
          %190 = dma.hbm_to_vmem [thread:$0]  %s183, 768, %s185, %s174, 64, 64, 4
        $region28: #{tpu_custom_call.1} parent=23 // pred_fallthru
          _
      $region24: #{tpu_custom_call.1} parent=5 // pred_fallthru
        _
      %p191 = scmp.le.s32.totalorder 1, %s15
      %p192 = scmp.lt.s32.totalorder %s15, 3
      %p193 = pnand %p191, %p192
      %p194 = pneg %p193
      // Predicated region
      $region29: #{tpu_custom_call.1} parent=5 // pred_check
        _
      $region30: #{tpu_custom_call.1} parent=5 // pred_check_branch
        %196 = sbr.rel (%p193) target = $region32
      $region31: #{tpu_custom_call.1} parent=5 // pred_region
        %s197 = ssub.s32 %s15, 1
        %s198 = sand.u32 %s66, 1
        %s199 = scalar_lea.sflag [#allocation3], %s198
        %s200 = sand.u32 %s66, 1
        %s201 = smul.addr %s200, 48
        %s202 = scalar_lea.vmem [#allocation2], %s201
        // Predicated region
        $region33: #{tpu_custom_call.1} parent=31 // pred_check
          %p203 = pneg %p79
        $region34: #{tpu_custom_call.1} parent=31 // pred_check_branch
          %205 = sbr.rel (%p203) target = $region36
        $region35: #{tpu_custom_call.1} parent=31 // pred_region
          %206 = dma.done %s199, 768
        $region36: #{tpu_custom_call.1} parent=31 // pred_fallthru
          _
        %s207 = smul.u32 2, %s24
        %p208 = scmp.lt.s32.totalorder %s207, 1
        %s209 = scalar_select %p208, %s207, 1
        %s210 = smul.addr %s209, 4
        %s211 = scalar_lea.vmem %s0, %s210
        %p212 = pneg %p53
        %p213 = pneg %p50
        %s214 = sand.u32 %s66, 1
        %s215 = scalar_lea.sflag [#allocation3], %s214
        %s216 = sand.u32 %s66, 1
        %s217 = smul.addr %s216, 48
        %s218 = scalar_lea.vmem [#allocation2], %s217
        %p219 = pneg %p79
        %p220 = pneg %p76
        %s221 = smul.u32 2, %s24
        %p222 = scmp.lt.s32.totalorder %s221, 1
        %s223 = scalar_select %p222, %s221, 1
        %s224 = smul.addr %s223, 8
        %s225 = scalar_lea.vmem %s2, %s224
        %p226 = pneg %p105
        %p227 = pneg %p102
        %p228 = pneg %p133
        %p229 = pneg %p130
        %s230 = sand.u32 %s120, 1
        %s231 = scalar_lea.sflag [#allocation4], %s230
        %s232 = sand.u32 %s120, 1
        %s233 = smul.addr %s232, 16
        %s234 = scalar_lea.vmem [#allocation5], %s233
        %s235 = smul.u32 2, %s24
        %p236 = scmp.lt.s32.totalorder %s235, 1
        %s237 = scalar_select %p236, %s235, 1
        %s238 = smul.addr %s237, 4
        %s239 = scalar_lea.vmem %s0, %s238
        %s240 = smul.u32 2, %s24
        %s241 = smul.u32 2, %s24
        %p242 = scmp.lt.s32.totalorder %s241, 1
        %s243 = scalar_select %p242, %s241, 1
        %s244 = smul.addr %s243, 8
        %s245 = scalar_lea.vmem %s2, %s244
        %s246 = smul.u32 2, %s24
        %s247 = smul.u32 2, %s24
        %v249 = vld [vmem:[%s239] sm:$0xf]
        %v250 = vld [vmem:[%s239 + $0x4] sm:$0xf]
        %v251 = vld [vmem:[%s202] sm:$0xf]
        %v252 = vld [vmem:[%s202 + $0x4] sm:$0xf]
        %v253 = vld [vmem:[%s202 + $0x8] sm:$0xf]
        %v254 = vld [vmem:[%s202 + $0xc] sm:$0xf]
        %v257 = vunpack.c.l.b16 %v249
        %v258 = vunpack.c.l.b16 %v250
        %v259 = vpack.c.b16 %v258, %v257
        %v264 = vunpack.c.l.b16 %v251
        %v265 = vunpack.c.l.b16 %v252
        %v266 = vunpack.c.l.b16 %v253
        %v267 = vunpack.c.l.b16 %v254
        %v268 = vpack.c.b16 %v265, %v264
        %v269 = vpack.c.b16 %v267, %v266
        %vm272 = vcmask 261120
        %v274 = vsel %vm272, %v259, 0
        %276 = vmatprep.subr.bf16.mxu0 0
        %277 = vmatpush1.bf16.msra.mxu0 0
        %278 = vmatprep.subr.bf16.mxu0 0
        %279 = vmatpush1.bf16.msra.mxu0 0
        %280 = vmatprep.subr.bf16.mxu0 0
        %281 = vmatpush1.bf16.msra.mxu0 0
        %282 = vmatprep.subr.bf16.mxu0 0
        %283 = vmatpush1.bf16.msra.mxu0 0
        %284 = vmatprep.subr.bf16.mxu0 0
        %285 = vmatpush1.bf16.msra.mxu0 0
        %286 = vmatprep.subr.bf16.mxu0 0
        %287 = vmatpush1.bf16.msra.mxu0 0
        %288 = vmatprep.subr.bf16.mxu0 0
        %289 = vmatpush1.bf16.msra.mxu0 %v269
        %290 = vmatprep.subr.bf16.mxu0 0
        %291 = vmatpush1.bf16.msra.mxu0 %v268
        %292 = vmatprep.subr.bf16.mxu0 0
        %293 = vmatpush2.bf16.msra.mxu0 0
        %294 = vmatprep.subr.bf16.mxu0 0
        %295 = vmatpush2.bf16.msra.mxu0 0
        %296 = vmatprep.subr.bf16.mxu0 0
        %297 = vmatpush2.bf16.msra.mxu0 0
        %298 = vmatprep.subr.bf16.mxu0 0
        %299 = vmatpush2.bf16.msra.mxu0 0
        %300 = vmatprep.subr.bf16.mxu0 0
        %301 = vmatpush2.bf16.msra.mxu0 0
        %302 = vmatprep.subr.bf16.mxu0 0
        %303 = vmatpush2.bf16.msra.mxu0 0
        %304 = vmatprep.subr.bf16.mxu0 0
        %305 = vmatpush2.bf16.msra.mxu0 0
        %306 = vmatprep.subr.bf16.mxu0 0
        %307 = vmatpush2.bf16.msra.mxu0 0
        %308 = vmatprep.mubr.bf16.mxu0 0
        %309 = vmatmul.mubr.bf16.gmra.mxu0 %v274
        %v310 = vpop.f32.mrf.mxu0
        %v311 = vadd.f32 0.0, %v310
        %v312 = vpop.f32.mrf.mxu0
        %v313 = vpop.f32.mrf.mxu0
        %v314 = vadd.f32 0.0, %v313
        %v315 = vpop.f32.mrf.mxu0
        %316 = vdwg.mxu0
        %s317 = scalar_lea.vmem %s202, 16 [#allocation2]
        %v318 = vld [vmem:[%s317] sm:$0xf]
        %v319 = vld [vmem:[%s317 + $0x4] sm:$0xf]
        %v320 = vld [vmem:[%s317 + $0x8] sm:$0xf]
        %v321 = vld [vmem:[%s317 + $0xc] sm:$0xf]
        %v326 = vunpack.c.l.b16 %v318
        %v327 = vunpack.c.l.b16 %v319
        %v328 = vunpack.c.l.b16 %v320
        %v329 = vunpack.c.l.b16 %v321
        %v330 = vpack.c.b16 %v327, %v326
        %v331 = vpack.c.b16 %v329, %v328
        %334 = vmatprep.subr.bf16.mxu0 0
        %335 = vmatpush1.bf16.msra.mxu0 0
        %336 = vmatprep.subr.bf16.mxu0 0
        %337 = vmatpush1.bf16.msra.mxu0 0
        %338 = vmatprep.subr.bf16.mxu0 0
        %339 = vmatpush1.bf16.msra.mxu0 0
        %340 = vmatprep.subr.bf16.mxu0 0
        %341 = vmatpush1.bf16.msra.mxu0 0
        %342 = vmatprep.subr.bf16.mxu0 0
        %343 = vmatpush1.bf16.msra.mxu0 0
        %344 = vmatprep.subr.bf16.mxu0 0
        %345 = vmatpush1.bf16.msra.mxu0 0
        %346 = vmatprep.subr.bf16.mxu0 0
        %347 = vmatpush1.bf16.msra.mxu0 %v331
        %348 = vmatprep.subr.bf16.mxu0 0
        %349 = vmatpush1.bf16.msra.mxu0 %v330
        %350 = vmatprep.subr.bf16.mxu0 0
        %351 = vmatpush2.bf16.msra.mxu0 0
        %352 = vmatprep.subr.bf16.mxu0 0
        %353 = vmatpush2.bf16.msra.mxu0 0
        %354 = vmatprep.subr.bf16.mxu0 0
        %355 = vmatpush2.bf16.msra.mxu0 0
        %356 = vmatprep.subr.bf16.mxu0 0
        %357 = vmatpush2.bf16.msra.mxu0 0
        %358 = vmatprep.subr.bf16.mxu0 0
        %359 = vmatpush2.bf16.msra.mxu0 0
        %360 = vmatprep.subr.bf16.mxu0 0
        %361 = vmatpush2.bf16.msra.mxu0 0
        %362 = vmatprep.subr.bf16.mxu0 0
        %363 = vmatpush2.bf16.msra.mxu0 0
        %364 = vmatprep.subr.bf16.mxu0 0
        %365 = vmatpush2.bf16.msra.mxu0 0
        %366 = vmatprep.mubr.bf16.mxu0 0
        %367 = vmatmul.mubr.bf16.gmra.mxu0 %v274
        %v368 = vpop.f32.mrf.mxu0
        %v369 = vadd.f32 0.0, %v368
        %v370 = vpop.f32.mrf.mxu0
        %v371 = vpop.f32.mrf.mxu0
        %v372 = vadd.f32 0.0, %v371
        %v373 = vpop.f32.mrf.mxu0
        %374 = vdwg.mxu0
        %v375 = vmax.f32 %v311, %v369
        %v376 = vmax.f32 %v314, %v372
        %s377 = scalar_lea.vmem %s202, 32 [#allocation2]
        %v378 = vld [vmem:[%s377] sm:$0xf]
        %v379 = vld [vmem:[%s377 + $0x4] sm:$0xf]
        %v380 = vld [vmem:[%s377 + $0x8] sm:$0xf]
        %v381 = vld [vmem:[%s377 + $0xc] sm:$0xf]
        %v386 = vunpack.c.l.b16 %v378
        %v387 = vunpack.c.l.b16 %v379
        %v388 = vunpack.c.l.b16 %v380
        %v389 = vunpack.c.l.b16 %v381
        %v390 = vpack.c.b16 %v387, %v386
        %v391 = vpack.c.b16 %v389, %v388
        %394 = vmatprep.subr.bf16.mxu0 0
        %395 = vmatpush1.bf16.msra.mxu0 0
        %396 = vmatprep.subr.bf16.mxu0 0
        %397 = vmatpush1.bf16.msra.mxu0 0
        %398 = vmatprep.subr.bf16.mxu0 0
        %399 = vmatpush1.bf16.msra.mxu0 0
        %400 = vmatprep.subr.bf16.mxu0 0
        %401 = vmatpush1.bf16.msra.mxu0 0
        %402 = vmatprep.subr.bf16.mxu0 0
        %403 = vmatpush1.bf16.msra.mxu0 0
        %404 = vmatprep.subr.bf16.mxu0 0
        %405 = vmatpush1.bf16.msra.mxu0 0
        %406 = vmatprep.subr.bf16.mxu0 0
        %407 = vmatpush1.bf16.msra.mxu0 %v391
        %408 = vmatprep.subr.bf16.mxu0 0
        %409 = vmatpush1.bf16.msra.mxu0 %v390
        %410 = vmatprep.subr.bf16.mxu0 0
        %411 = vmatpush2.bf16.msra.mxu0 0
        %412 = vmatprep.subr.bf16.mxu0 0
        %413 = vmatpush2.bf16.msra.mxu0 0
        %414 = vmatprep.subr.bf16.mxu0 0
        %415 = vmatpush2.bf16.msra.mxu0 0
        %416 = vmatprep.subr.bf16.mxu0 0
        %417 = vmatpush2.bf16.msra.mxu0 0
        %418 = vmatprep.subr.bf16.mxu0 0
        %419 = vmatpush2.bf16.msra.mxu0 0
        %420 = vmatprep.subr.bf16.mxu0 0
        %421 = vmatpush2.bf16.msra.mxu0 0
        %422 = vmatprep.subr.bf16.mxu0 0
        %423 = vmatpush2.bf16.msra.mxu0 0
        %424 = vmatprep.subr.bf16.mxu0 0
        %425 = vmatpush2.bf16.msra.mxu0 0
        %426 = vmatprep.mubr.bf16.mxu0 0
        %427 = vmatmul.mubr.bf16.gmra.mxu0 %v274
        %v428 = vpop.f32.mrf.mxu0
        %v429 = vadd.f32 0.0, %v428
        %v430 = vpop.f32.mrf.mxu0
        %v431 = vpop.f32.mrf.mxu0
        %v432 = vadd.f32 0.0, %v431
        %v433 = vpop.f32.mrf.mxu0
        %434 = vdwg.mxu0
        %v435 = vmax.f32 %v375, %v429
        %v436 = vmax.f32 %v376, %v432
        %v437 = vld [vmem:[%s245] sm:$0xff]
        %v438 = vld [vmem:[%s245 + $0x8] sm:$0xff]
        %s439 = smul.u32 %s25, 128
        %v440 = vlaneseq
        %v441 = vand.u32 %v440, 127
        %v442 = vstv %s439
        %v443 = vadd.s32 %v442, %v441
        %444 = vset.pattern.permute.xlu0 0
        %445 = vperm.xlu0 %444, %v437
        %v446 = vpop.permute.xlu0 %445
        %447 = vset.pattern.permute.xlu0 0
        %448 = vperm.xlu0 %447, %v438
        %v449 = vpop.permute.xlu0 %448
        %vm450 = vcmp.eq.s32.totalorder %v443, %v446
        %vm451 = vcmp.eq.s32.totalorder %v443, %v449
        %v452 = vsel %vm450, %v435, -2.0
        %v453 = vsel %vm451, %v436, -2.0
        %454 = vmax.xlane.f32.xlu0 %v452
        %v455 = vpop.xlane.xlu0 %454
        %456 = vmax.xlane.f32.xlu0 %v453
        %v457 = vpop.xlane.xlu0 %456
        %v458 = vmul.f32 %v455, %v455
        %v459 = vmul.f32 %v457, %v457
        %v460 = vsub.f32 1.0, %v458
        %v461 = vsub.f32 1.0, %v459
        %v462 = vmax.f32 %v460, 0.0
        %v463 = vmax.f32 %v461, 0.0
        %v464 = vmin.f32 %v462, 1.0
        %v465 = vmin.f32 %v463, 1.0
        %v466 = vrsqrt.pop %v464
        %v467 = vmul.f32 %v464, %v466
        %vm468 = vcmp.eq.f32.partialorder %v464, inf
        %v469 = vsel %vm468, %v464, %v467
        %vm470 = vcmp.eq.f32.partialorder %v464, 0.0
        %v471 = vand.u32 %v464, 2147483648
        %v472 = vsel %vm470, %v471, %v469
        %v473 = vrsqrt.pop %v465
        %v474 = vmul.f32 %v465, %v473
        %vm475 = vcmp.eq.f32.partialorder %v465, inf
        %v476 = vsel %vm475, %v465, %v474
        %vm477 = vcmp.eq.f32.partialorder %v465, 0.0
        %v478 = vand.u32 %v465, 2147483648
        %v479 = vsel %vm477, %v478, %v476
        %v480 = vmul.f32 %v455, 0.87758255
        %v481 = vmul.f32 %v457, 0.87758255
        %v482 = vmul.f32 %v472, 0.47942555
        %v483 = vmul.f32 %v479, 0.47942555
        %v484 = vsub.f32 %v480, %v482
        %v485 = vsub.f32 %v481, %v483
        %vm486 = vcmp.gt.f32.partialorder %v455, -0.87758255
        %vm487 = vcmp.gt.f32.partialorder %v457, -0.87758255
        %v488 = vsub.f32 %v455, 0.23971277
        %v489 = vsub.f32 %v457, 0.23971277
        %v490 = vsel %vm486, %v484, %v488
        %v491 = vsel %vm487, %v485, %v489
        %v492 = vsel %vm450, %v490, %v435
        %v493 = vsel %vm451, %v491, %v436
        %v494 = vmul.f32 %v492, 30.0
        %v495 = vmul.f32 %v493, 30.0
        %496 = vst [vmem:[%s234] sm:$0xff] %v494
        %497 = vst [vmem:[%s234 + $0x8] sm:$0xff] %v495
        %s498 = sand.u32 %s120, 1
        %s499 = scalar_lea.sflag [#allocation4], %s498
        %s500 = sand.u32 %s120, 1
        %s501 = smul.addr %s500, 16
        %s502 = scalar_lea.vmem [#allocation5], %s501
        // Predicated region
        $region37: #{tpu_custom_call.1} parent=31 // pred_check
          %p503 = pneg %p130
        $region38: #{tpu_custom_call.1} parent=31 // pred_check_branch
          %505 = sbr.rel (%p503) target = $region40
        $region39: #{tpu_custom_call.1} parent=31 // pred_region
          %s506 = smul.u32 2, %s24
          %s508 = ssub.s32 256, 256
          %509 = vsyncadd %s499, %s508
          %s510 = smul.addr %s506, 2
          %s511 = sadd.s32 %s25, %s510
          %s512 = smul.addr %s511, 128
          %s513 = scalar_lea.hbm %s3, %s512
          %s514 = sshll.u32 %s502, 4
          %s515 = int_to_ptr.vmem [resolvable:$true] %s514
          %520 = dma.vmem_to_hbm [thread:$0]  %s515, 256, %s513, %s499, 128, 256, 8
        $region40: #{tpu_custom_call.1} parent=31 // pred_fallthru
          _
      $region32: #{tpu_custom_call.1} parent=5 // pred_fallthru
        _
      %p521 = scmp.le.s32.totalorder 2, %s15
      // Predicated region
      $region41: #{tpu_custom_call.1} parent=5 // pred_check
        %p522 = pneg %p521
      $region42: #{tpu_custom_call.1} parent=5 // pred_check_branch
        %524 = sbr.rel (%p522) target = $region44
      $region43: #{tpu_custom_call.1} parent=5 // pred_region
        %s525 = ssub.s32 %s15, 2
        // Predicated region
        $region45: #{tpu_custom_call.1} parent=43 // pred_check
          %p526 = pneg %p136
        $region46: #{tpu_custom_call.1} parent=43 // pred_check_branch
          %528 = sbr.rel (%p526) target = $region48
        $region47: #{tpu_custom_call.1} parent=43 // pred_region
          %s529 = sand.u32 %s121, 1
          %s530 = scalar_lea.sflag [#allocation4], %s529
          %s531 = sand.u32 %s121, 1
          %s532 = smul.addr %s531, 16
          %s533 = scalar_lea.vmem [#allocation5], %s532
          %534 = dma.done %s530, 256
        $region48: #{tpu_custom_call.1} parent=43 // pred_fallthru
          _
      $region44: #{tpu_custom_call.1} parent=5 // pred_fallthru
        _
    $region6: #{tpu_custom_call.1} parent=1 // loop_footer
      %s19 = sadd.s32 1, %s15
    $region7: #{tpu_custom_call.1} parent=1 // loop_footer_branch
      %14 = sbr.rel target = $region3
    $region8: #{tpu_custom_call.1} parent=1 // loop_exit
      _
    %535 = vsyncpa [#allocation3], 1
    %s536 = scalar_lea.sflag [#allocation3], 1
    %537 = vsyncpa %s536, 1
    %538 = vsyncpa [#allocation4], 1
    %s539 = scalar_lea.sflag [#allocation4], 1
    %540 = vsyncpa %s539, 1

</llo_original>
